<compile_context>
chip_gen: v6e
topology: v6e:2x2x1
jax: 0.10.0
libtpu: 0.0.40
codegen_flags: <defaults>
</compile_context>

<pallas_src>
import jax
import jax.numpy as jnp
from jax.experimental import pallas as pl
from jax.experimental.pallas import tpu as pltpu


# ----------------------------- Pallas kernel -------------------------------

def _patch_embed_kernel(x_ref, w_ref, b_ref, o_ref):
    """One M tile: out = x @ w + b  (bf16 inputs, f32 MXU accumulation)."""
    acc = jnp.dot(x_ref[...], w_ref[...], preferred_element_type=jnp.float32)
    o_ref[...] = (acc + b_ref[...].astype(jnp.float32)).astype(o_ref.dtype)


def _choose_tm(M, K, D, *, target=256, vmem_budget=24 << 20):
    """M-tile size: multiple of 16, capped by M and a VMEM working-set budget."""
    if M >= target:
        tm = target
    else:
        tm = max(16, ((M + 15) // 16) * 16)

    def working_set(t):
        # double-buffered bf16 tiles: x, w (resident but budget 2x), bias, out
        return 2 * (t * K + K * D + D + t * D) * 2

    while tm > 16 and working_set(tm) > vmem_budget:
        tm //= 2
    return max(16, (tm // 16) * 16)


def patch_embed_matmul(x_patches, w, b, *, tm=None):
    """x_patches: [M, K] bf16, w: [K, D] bf16, b: [1, D] bf16 -> [M, D] bf16."""
    M, K = x_patches.shape
    _, D = w.shape
    if tm is None:
        tm = _choose_tm(M, K, D)

    Mp = pl.cdiv(M, tm) * tm
    if Mp != M:
        # Pad M up to the tile; pad rows are computed (cheap) and sliced off.
        x_patches = jnp.pad(x_patches, ((0, Mp - M), (0, 0)))

    out = pl.pallas_call(
        _patch_embed_kernel,
        out_shape=jax.ShapeDtypeStruct((Mp, D), jnp.bfloat16),
        grid_spec=pltpu.PrefetchScalarGridSpec(
            num_scalar_prefetch=0,
            grid=(Mp // tm,),
            in_specs=[
                pl.BlockSpec((tm, K), lambda i: (i, 0)),   # x tile (streams)
                pl.BlockSpec((K, D), lambda i: (0, 0)),    # weight (resident)
                pl.BlockSpec((1, D), lambda i: (0, 0)),    # bias   (resident)
            ],
            out_specs=pl.BlockSpec((tm, D), lambda i: (i, 0)),
        ),
        compiler_params=pltpu.CompilerParams(
            dimension_semantics=("parallel",),             # megacore over M
        ),
    )(x_patches, w, b)

    return out[:M] if Mp != M else out


# ------------------------------- JAX glue -----------------------------------

def _extract_patches(x, patch):
    """NCHW image -> [B * num_patches, C * P * P] (patchify, no compute)."""
    # TODO(synk): for very large batches, fold this patchify into the kernel's
    # input BlockSpec (free (B,C,nh,P,nw,P) reshape + in-kernel contraction) to
    # avoid the single XLA transpose copy of the input; kept in XLA here for
    # robust lowering since the (..., P) minor dims are lane-unfriendly.
    B, C, H, W = x.shape
    nh, nw = H // patch, W // patch
    x = x.reshape(B, C, nh, patch, nw, patch)
    x = x.transpose(0, 2, 4, 1, 3, 5)          # (B, nh, nw, C, P, P)
    return x.reshape(B * nh * nw, C * patch * patch)


def data2seq_image_forward(x_nchw, w_conv, b_conv, *, patch):
    """Equivalent of Data2Seq('image', dim).forward(x) -> (B, N, D) bf16.

    x_nchw : (B, C, H, W) bf16
    w_conv : (D, C, P, P) bf16  (Conv2d weight)
    b_conv : (D,)         bf16  (Conv2d bias)
    """
    B, C, H, W = x_nchw.shape
    D = w_conv.shape[0]
    nh, nw = H // patch, W // patch

    x_patches = _extract_patches(x_nchw, patch)                # [M, K]
    w_mat = w_conv.reshape(D, C * patch * patch).T             # [K, D]
    b_mat = b_conv.reshape(1, D)                               # [1, D]

    out = patch_embed_matmul(x_patches, w_mat, b_mat)          # [M, D]
    # conv -> flatten(2).transpose(1,2) ordering == (b, nh, nw) row-major
    return out.reshape(B, nh * nw, D)


# --------------------------------- main --------------------------------------

if __name__ == "__main__":
    key = jax.random.PRNGKey(0)
    k_x, k_w, k_b = jax.random.split(key, 3)

    # Small shapes consistent with the module: RGB images, ViT-style patch embed.
    B, C, H, W = 2, 3, 64, 64
    PATCH = 16
    EMBED_DIM = 128            # "dim" argument of Data2Seq

    x = jax.random.normal(k_x, (B, C, H, W), dtype=jnp.float32
                          ).astype(jnp.bfloat16)
    w_conv = (0.02 * jax.random.normal(k_w, (EMBED_DIM, C, PATCH, PATCH),
                                       dtype=jnp.float32)).astype(jnp.bfloat16)
    b_conv = (0.02 * jax.random.normal(k_b, (EMBED_DIM,),
                                       dtype=jnp.float32)).astype(jnp.bfloat16)

    out = data2seq_image_forward(x, w_conv, b_conv, patch=PATCH)
    out = jax.block_until_ready(out)

    # Shape / dtype checks (matches PatchEmbed: (B, N, D) bf16).
    N = (H // PATCH) * (W // PATCH)
    assert out.shape == (B, N, EMBED_DIM), out.shape
    assert out.dtype == jnp.bfloat16

    # Numeric sanity check against a plain-JAX reference (same bf16 inputs).
    x_p = _extract_patches(x, PATCH).astype(jnp.float32)
    w_m = w_conv.reshape(EMBED_DIM, -1).T.astype(jnp.float32)
    ref = (x_p @ w_m + b_conv.astype(jnp.float32)[None, :]).reshape(out.shape)
    assert jnp.allclose(out.astype(jnp.float32), ref, atol=0.05, rtol=0.05)

    # TODO(synk): text/graph/audio/time-series modality branches (CLIP
    # tokenizer, graph tokenizer, torchaudio fbank) have no Pallas-expressible
    # hot path and are not implemented.
    print("KERNEL_OK")
</pallas_src>

<mosaic_0001>
module attributes {stable_mosaic.version = 11 : i64} {
  func.func @_patch_embed_kernel(%arg0: i32, %arg1: memref<32x768xbf16, #tpu.memory_space<vmem>>, %arg2: memref<768x128xbf16, #tpu.memory_space<vmem>>, %arg3: memref<1x128xbf16, #tpu.memory_space<vmem>>, %arg4: memref<32x128xbf16, #tpu.memory_space<vmem>>) attributes {dimension_semantics = [#tpu.dimension_semantics<parallel>], iteration_bounds = array<i64: 1>, scalar_prefetch = 0 : i64, scratch_operands = 0 : i64, tpu.core_type = #tpu.core_type<tc>, window_params = [{transform_indices = @transform_0, window_bounds = array<i64: 32, 768>}, {pipeline_mode = #tpu.pipeline_mode<synchronous>, transform_indices = @transform_1, window_bounds = array<i64: 768, 128>}, {pipeline_mode = #tpu.pipeline_mode<synchronous>, transform_indices = @transform_2, window_bounds = array<i64: 1, 128>}, {transform_indices = @transform_3, window_bounds = array<i64: 32, 128>}]} {
    %c0 = arith.constant 0 : index
    %c0_0 = arith.constant 0 : index
    %0 = vector.load %arg1[%c0, %c0_0] : memref<32x768xbf16, #tpu.memory_space<vmem>>, vector<32x768xbf16>
    %c0_1 = arith.constant 0 : index
    %c0_2 = arith.constant 0 : index
    %1 = vector.load %arg2[%c0_1, %c0_2] : memref<768x128xbf16, #tpu.memory_space<vmem>>, vector<768x128xbf16>
    %cst = arith.constant dense<0.000000e+00> : vector<32x128xf32>
    %2 = tpu.matmul %0, %1, %cst {dimension_numbers = #tpu.dot_dimension_numbers<[1], [0], [0], [1], [0, 0, 1, 1], [], []>} : vector<32x768xbf16>, vector<768x128xbf16>, vector<32x128xf32> -> vector<32x128xf32>
    %c0_3 = arith.constant 0 : index
    %c0_4 = arith.constant 0 : index
    %3 = vector.load %arg3[%c0_3, %c0_4] : memref<1x128xbf16, #tpu.memory_space<vmem>>, vector<1x128xbf16>
    %4 = arith.extf %3 : vector<1x128xbf16> to vector<1x128xf32>
    %5 = vector.broadcast %4 : vector<1x128xf32> to vector<32x128xf32>
    %6 = arith.addf %2, %5 : vector<32x128xf32>
    %7 = arith.truncf %6 : vector<32x128xf32> to vector<32x128xbf16>
    %c0_5 = arith.constant 0 : index
    %c0_6 = arith.constant 0 : index
    %8 = vector.load %arg4[%c0_5, %c0_6] : memref<32x128xbf16, #tpu.memory_space<vmem>>, vector<32x128xbf16>
    tpu.vector_store %arg4[%c0_5, %c0_6], %7 {strides = array<i32>} : memref<32x128xbf16, #tpu.memory_space<vmem>>, vector<32x128xbf16>,
    return
  }
  func.func @transform_0(%arg0: i32) -> (i32, i32) {
    %c0_i32 = arith.constant 0 : i32
    %c0_i32_0 = arith.constant 0 : i32
    return %arg0, %c0_i32 : i32, i32
  }
  func.func @transform_1(%arg0: i32) -> (i32, i32) {
    %c0_i32 = arith.constant 0 : i32
    %c0_i32_0 = arith.constant 0 : i32
    %c0_i32_1 = arith.constant 0 : i32
    return %c0_i32, %c0_i32_0 : i32, i32
  }
  func.func @transform_2(%arg0: i32) -> (i32, i32) {
    %c0_i32 = arith.constant 0 : i32
    %c0_i32_0 = arith.constant 0 : i32
    %c0_i32_1 = arith.constant 0 : i32
    return %c0_i32, %c0_i32_0 : i32, i32
  }
  func.func @transform_3(%arg0: i32) -> (i32, i32) {
    %c0_i32 = arith.constant 0 : i32
    %c0_i32_0 = arith.constant 0 : i32
    return %arg0, %c0_i32 : i32, i32
  }
}

</mosaic_0001>

<llo_original>
// kernel: tpu_custom_call.1
$region0: #{tpu_custom_call.1}
  #allocation0 [shape = 'u32[]', space=smem, size = 0x4, offset = 0x4, fixed_abs, tag = 'smem constant byte address 0x4 - core index']
  #allocation1 [shape = 'u32[144,128]{1,0:T(1,128)}', space=vmem, size = 0x12000, scoped, tag = 'internal scratch']
  %s0 = inlined_call_operand.hbm [shape: bf16[32,768], index: 0, kind: input, shape index: {}]
  %s1 = inlined_call_operand.hbm [shape: bf16[768,128], index: 1, kind: input, shape index: {}]
  %s2 = inlined_call_operand.vmem [shape: bf16[1,128], index: 2, kind: input, shape index: {}]
  %s3 = inlined_call_operand.hbm [shape: bf16[32,128], index: 3, kind: output, shape index: {}]
  %s4 = sld [smem:[#allocation0]]
  $region30: #{tpu_custom_call.1} parent=0
    _
  %s6 = ssub.s32 1, %s4
  %s7 = scalar_select 0, %s6, %s4
  $region1: #{tpu_custom_call.1} parent=0
    #allocation2 [shape = 'u8[49152]{0}', space=vmem, size = 0xc000, scoped, tag = 'input window, operand 0, single buffered']
    #allocation3 [shape = 's32[1]{0}', space=sflag, size = 0x4, scoped, tag = 'scoped memory for tpu_custom_call.1']
    #allocation4 [shape = 's32[1]{0}', space=sflag, size = 0x4, scoped, tag = 'scoped memory for tpu_custom_call.1']
    #allocation5 [shape = 'u8[196608]{0}', space=vmem, size = 0x30000, scoped, tag = 'input window, operand 1, single buffered']
    #allocation6 [shape = 's32[1]{0}', space=sflag, size = 0x4, scoped, tag = 'scoped memory for tpu_custom_call.1']
    #allocation7 [shape = 'u8[8192]{0}', space=vmem, size = 0x2000, scoped, tag = 'output window, operand 0, single buffered']
    %8 = vsyncpa [#allocation3], 0
    %9 = vsyncpa [#allocation6], 0
    %10 = vsyncpa [#allocation4], 0
    // Predicated region
    $region2: #{tpu_custom_call.1} parent=1 // pred_check
      _
    $region3: #{tpu_custom_call.1} parent=1 // pred_check_branch
      %12 = sbr.rel (0) target = $region5
    $region4: #{tpu_custom_call.1} parent=1 // pred_region
      %s14 = ssub.s32 1536, 1536
      %15 = vsyncadd [#allocation3], %s14
      %s16 = sshll.u32 [#allocation2], 4
      %s17 = int_to_ptr.vmem [resolvable:$true] %s16
      %22 = dma.hbm_to_vmem [thread:$0]  %s0, 1536, %s17, [#allocation3], 384, 384, 24
    $region5: #{tpu_custom_call.1} parent=1 // pred_fallthru
      _
    // Predicated region
    $region6: #{tpu_custom_call.1} parent=1 // pred_check
      _
    $region7: #{tpu_custom_call.1} parent=1 // pred_check_branch
      %24 = sbr.rel (0) target = $region9
    $region8: #{tpu_custom_call.1} parent=1 // pred_region
      %s26 = ssub.s32 6144, 6144
      %27 = vsyncadd [#allocation6], %s26
      %s28 = sshll.u32 [#allocation5], 4
      %s29 = int_to_ptr.vmem [resolvable:$true] %s28
      %34 = dma.hbm_to_vmem [thread:$0]  %s1, 6144, %s29, [#allocation6], 64, 64, 4
    $region9: #{tpu_custom_call.1} parent=1 // pred_fallthru
      _
    // Predicated region
    $region10: #{tpu_custom_call.1} parent=1 // pred_check
      _
    $region11: #{tpu_custom_call.1} parent=1 // pred_check_branch
      %36 = sbr.rel (0) target = $region13
    $region12: #{tpu_custom_call.1} parent=1 // pred_region
      _
    $region13: #{tpu_custom_call.1} parent=1 // pred_fallthru
      _
    // Predicated region
    $region14: #{tpu_custom_call.1} parent=1 // pred_check
      _
    $region15: #{tpu_custom_call.1} parent=1 // pred_check_branch
      %38 = sbr.rel (0) target = $region17
    $region16: #{tpu_custom_call.1} parent=1 // pred_region
      %39 = dma.done [#allocation3], 1536
    $region17: #{tpu_custom_call.1} parent=1 // pred_fallthru
      _
    // Predicated region
    $region18: #{tpu_custom_call.1} parent=1 // pred_check
      _
    $region19: #{tpu_custom_call.1} parent=1 // pred_check_branch
      %41 = sbr.rel (0) target = $region21
    $region20: #{tpu_custom_call.1} parent=1 // pred_region
      %42 = dma.done [#allocation6], 6144
    $region21: #{tpu_custom_call.1} parent=1 // pred_fallthru
      _
    %v44 = vld [vmem:[#allocation2] sm:$0xff]
    %v45 = vld [vmem:[#allocation2 + $0x8] sm:$0xff]
    %v46 = vld [vmem:[#allocation2 + $0x10] sm:$0xff]
    %v47 = vld [vmem:[#allocation2 + $0x18] sm:$0xff]
    %v48 = vld [vmem:[#allocation2 + $0x20] sm:$0xff]
    %v49 = vld [vmem:[#allocation2 + $0x28] sm:$0xff]
    %v50 = vld [vmem:[#allocation2 + $0x30] sm:$0xff]
    %v51 = vld [vmem:[#allocation2 + $0x38] sm:$0xff]
    %v52 = vld [vmem:[#allocation2 + $0x40] sm:$0xff]
    %v53 = vld [vmem:[#allocation2 + $0x48] sm:$0xff]
    %v54 = vld [vmem:[#allocation2 + $0x50] sm:$0xff]
    %v55 = vld [vmem:[#allocation2 + $0x58] sm:$0xff]
    %v56 = vld [vmem:[#allocation5] sm:$0xf]
    %v57 = vld [vmem:[#allocation5 + $0x4] sm:$0xf]
    %v58 = vld [vmem:[#allocation5 + $0x8] sm:$0xf]
    %v59 = vld [vmem:[#allocation5 + $0xc] sm:$0xf]
    %v60 = vld [vmem:[#allocation5 + $0x10] sm:$0xf]
    %v61 = vld [vmem:[#allocation5 + $0x14] sm:$0xf]
    %v62 = vld [vmem:[#allocation5 + $0x18] sm:$0xf]
    %v63 = vld [vmem:[#allocation5 + $0x1c] sm:$0xf]
    %v64 = vld [vmem:[#allocation5 + $0x20] sm:$0xf]
    %v65 = vld [vmem:[#allocation5 + $0x24] sm:$0xf]
    %v66 = vld [vmem:[#allocation5 + $0x28] sm:$0xf]
    %v67 = vld [vmem:[#allocation5 + $0x2c] sm:$0xf]
    %v68 = vld [vmem:[#allocation5 + $0x30] sm:$0xf]
    %v69 = vld [vmem:[#allocation5 + $0x34] sm:$0xf]
    %v70 = vld [vmem:[#allocation5 + $0x38] sm:$0xf]
    %v71 = vld [vmem:[#allocation5 + $0x3c] sm:$0xf]
    %v72 = vld [vmem:[#allocation5 + $0x40] sm:$0xf]
    %v73 = vld [vmem:[#allocation5 + $0x44] sm:$0xf]
    %v74 = vld [vmem:[#allocation5 + $0x48] sm:$0xf]
    %v75 = vld [vmem:[#allocation5 + $0x4c] sm:$0xf]
    %v76 = vld [vmem:[#allocation5 + $0x50] sm:$0xf]
    %v77 = vld [vmem:[#allocation5 + $0x54] sm:$0xf]
    %v78 = vld [vmem:[#allocation5 + $0x58] sm:$0xf]
    %v79 = vld [vmem:[#allocation5 + $0x5c] sm:$0xf]
    %v80 = vld [vmem:[#allocation5 + $0x60] sm:$0xf]
    %v81 = vld [vmem:[#allocation5 + $0x64] sm:$0xf]
    %v82 = vld [vmem:[#allocation5 + $0x68] sm:$0xf]
    %v83 = vld [vmem:[#allocation5 + $0x6c] sm:$0xf]
    %v84 = vld [vmem:[#allocation5 + $0x70] sm:$0xf]
    %v85 = vld [vmem:[#allocation5 + $0x74] sm:$0xf]
    %v86 = vld [vmem:[#allocation5 + $0x78] sm:$0xf]
    %v87 = vld [vmem:[#allocation5 + $0x7c] sm:$0xf]
    %v88 = vld [vmem:[#allocation5 + $0x80] sm:$0xf]
    %v89 = vld [vmem:[#allocation5 + $0x84] sm:$0xf]
    %v90 = vld [vmem:[#allocation5 + $0x88] sm:$0xf]
    %v91 = vld [vmem:[#allocation5 + $0x8c] sm:$0xf]
    %v92 = vld [vmem:[#allocation5 + $0x90] sm:$0xf]
    %v93 = vld [vmem:[#allocation5 + $0x94] sm:$0xf]
    %v94 = vld [vmem:[#allocation5 + $0x98] sm:$0xf]
    %v95 = vld [vmem:[#allocation5 + $0x9c] sm:$0xf]
    %v96 = vld [vmem:[#allocation5 + $0xa0] sm:$0xf]
    %v97 = vld [vmem:[#allocation5 + $0xa4] sm:$0xf]
    %v98 = vld [vmem:[#allocation5 + $0xa8] sm:$0xf]
    %v99 = vld [vmem:[#allocation5 + $0xac] sm:$0xf]
    %v100 = vld [vmem:[#allocation5 + $0xb0] sm:$0xf]
    %v101 = vld [vmem:[#allocation5 + $0xb4] sm:$0xf]
    %v102 = vld [vmem:[#allocation5 + $0xb8] sm:$0xf]
    %v103 = vld [vmem:[#allocation5 + $0xbc] sm:$0xf]
    %v104 = vld [vmem:[#allocation5 + $0xc0] sm:$0xf]
    %v105 = vld [vmem:[#allocation5 + $0xc4] sm:$0xf]
    %v106 = vld [vmem:[#allocation5 + $0xc8] sm:$0xf]
    %v107 = vld [vmem:[#allocation5 + $0xcc] sm:$0xf]
    %v108 = vld [vmem:[#allocation5 + $0xd0] sm:$0xf]
    %v109 = vld [vmem:[#allocation5 + $0xd4] sm:$0xf]
    %v110 = vld [vmem:[#allocation5 + $0xd8] sm:$0xf]
    %v111 = vld [vmem:[#allocation5 + $0xdc] sm:$0xf]
    %v112 = vld [vmem:[#allocation5 + $0xe0] sm:$0xf]
    %v113 = vld [vmem:[#allocation5 + $0xe4] sm:$0xf]
    %v114 = vld [vmem:[#allocation5 + $0xe8] sm:$0xf]
    %v115 = vld [vmem:[#allocation5 + $0xec] sm:$0xf]
    %v116 = vld [vmem:[#allocation5 + $0xf0] sm:$0xf]
    %v117 = vld [vmem:[#allocation5 + $0xf4] sm:$0xf]
    %v118 = vld [vmem:[#allocation5 + $0xf8] sm:$0xf]
    %v119 = vld [vmem:[#allocation5 + $0xfc] sm:$0xf]
    %v120 = vld [vmem:[#allocation5 + $0x100] sm:$0xf]
    %v121 = vld [vmem:[#allocation5 + $0x104] sm:$0xf]
    %v122 = vld [vmem:[#allocation5 + $0x108] sm:$0xf]
    %v123 = vld [vmem:[#allocation5 + $0x10c] sm:$0xf]
    %v124 = vld [vmem:[#allocation5 + $0x110] sm:$0xf]
    %v125 = vld [vmem:[#allocation5 + $0x114] sm:$0xf]
    %v126 = vld [vmem:[#allocation5 + $0x118] sm:$0xf]
    %v127 = vld [vmem:[#allocation5 + $0x11c] sm:$0xf]
    %v128 = vld [vmem:[#allocation5 + $0x120] sm:$0xf]
    %v129 = vld [vmem:[#allocation5 + $0x124] sm:$0xf]
    %v130 = vld [vmem:[#allocation5 + $0x128] sm:$0xf]
    %v131 = vld [vmem:[#allocation5 + $0x12c] sm:$0xf]
    %v132 = vld [vmem:[#allocation5 + $0x130] sm:$0xf]
    %v133 = vld [vmem:[#allocation5 + $0x134] sm:$0xf]
    %v134 = vld [vmem:[#allocation5 + $0x138] sm:$0xf]
    %v135 = vld [vmem:[#allocation5 + $0x13c] sm:$0xf]
    %v136 = vld [vmem:[#allocation5 + $0x140] sm:$0xf]
    %v137 = vld [vmem:[#allocation5 + $0x144] sm:$0xf]
    %v138 = vld [vmem:[#allocation5 + $0x148] sm:$0xf]
    %v139 = vld [vmem:[#allocation5 + $0x14c] sm:$0xf]
    %v140 = vld [vmem:[#allocation5 + $0x150] sm:$0xf]
    %v141 = vld [vmem:[#allocation5 + $0x154] sm:$0xf]
    %v142 = vld [vmem:[#allocation5 + $0x158] sm:$0xf]
    %v143 = vld [vmem:[#allocation5 + $0x15c] sm:$0xf]
    %v144 = vld [vmem:[#allocation5 + $0x160] sm:$0xf]
    %v145 = vld [vmem:[#allocation5 + $0x164] sm:$0xf]
    %v146 = vld [vmem:[#allocation5 + $0x168] sm:$0xf]
    %v147 = vld [vmem:[#allocation5 + $0x16c] sm:$0xf]
    %v148 = vld [vmem:[#allocation5 + $0x170] sm:$0xf]
    %v149 = vld [vmem:[#allocation5 + $0x174] sm:$0xf]
    %v150 = vld [vmem:[#allocation5 + $0x178] sm:$0xf]
    %v151 = vld [vmem:[#allocation5 + $0x17c] sm:$0xf]
    %v152 = vld [vmem:[%s2] sm:$0x1]
    %v153 = vunpack.c.l.bf16 %v152
    %v154 = vlaneseq
    %v155 = vshrl.u32 %v154, 7
    %v156 = vsub.s32 0, %v155
    %v157 = vrot.slane %v153, %v156
    %v170 = vunpack.c.l.b16 %v44
    %v171 = vunpack.c.h.b16 %v44
    %v172 = vunpack.c.l.b16 %v45
    %v173 = vunpack.c.h.b16 %v45
    %v174 = vunpack.c.l.b16 %v46
    %v175 = vunpack.c.h.b16 %v46
    %v176 = vunpack.c.l.b16 %v47
    %v177 = vunpack.c.h.b16 %v47
    %v178 = vunpack.c.l.b16 %v48
    %v179 = vunpack.c.h.b16 %v48
    %v180 = vunpack.c.l.b16 %v49
    %v181 = vunpack.c.h.b16 %v49
    %v182 = vunpack.c.l.b16 %v50
    %v183 = vunpack.c.h.b16 %v50
    %v184 = vunpack.c.l.b16 %v51
    %v185 = vunpack.c.h.b16 %v51
    %v186 = vunpack.c.l.b16 %v52
    %v187 = vunpack.c.h.b16 %v52
    %v188 = vunpack.c.l.b16 %v53
    %v189 = vunpack.c.h.b16 %v53
    %v190 = vunpack.c.l.b16 %v54
    %v191 = vunpack.c.h.b16 %v54
    %v192 = vunpack.c.l.b16 %v55
    %v193 = vunpack.c.h.b16 %v55
    %v194 = vpack.c.b16 %v176, %v170
    %v195 = vpack.c.b16 %v177, %v171
    %v196 = vpack.c.b16 %v178, %v172
    %v197 = vpack.c.b16 %v179, %v173
    %v198 = vpack.c.b16 %v180, %v174
    %v199 = vpack.c.b16 %v181, %v175
    %v200 = vpack.c.b16 %v188, %v182
    %v201 = vpack.c.b16 %v189, %v183
    %v202 = vpack.c.b16 %v190, %v184
    %v203 = vpack.c.b16 %v191, %v185
    %v204 = vpack.c.b16 %v192, %v186
    %v205 = vpack.c.b16 %v193, %v187
    %v314 = vunpack.c.l.b16 %v56
    %v315 = vunpack.c.l.b16 %v57
    %v316 = vunpack.c.l.b16 %v58
    %v317 = vunpack.c.l.b16 %v59
    %v318 = vunpack.c.l.b16 %v60
    %v319 = vunpack.c.l.b16 %v61
    %v320 = vunpack.c.l.b16 %v62
    %v321 = vunpack.c.l.b16 %v63
    %v322 = vunpack.c.l.b16 %v64
    %v323 = vunpack.c.l.b16 %v65
    %v324 = vunpack.c.l.b16 %v66
    %v325 = vunpack.c.l.b16 %v67
    %v326 = vunpack.c.l.b16 %v68
    %v327 = vunpack.c.l.b16 %v69
    %v328 = vunpack.c.l.b16 %v70
    %v329 = vunpack.c.l.b16 %v71
    %v330 = vunpack.c.l.b16 %v72
    %v331 = vunpack.c.l.b16 %v73
    %v332 = vunpack.c.l.b16 %v74
    %v333 = vunpack.c.l.b16 %v75
    %v334 = vunpack.c.l.b16 %v76
    %v335 = vunpack.c.l.b16 %v77
    %v336 = vunpack.c.l.b16 %v78
    %v337 = vunpack.c.l.b16 %v79
    %v338 = vunpack.c.l.b16 %v80
    %v339 = vunpack.c.l.b16 %v81
    %v340 = vunpack.c.l.b16 %v82
    %v341 = vunpack.c.l.b16 %v83
    %v342 = vunpack.c.l.b16 %v84
    %v343 = vunpack.c.l.b16 %v85
    %v344 = vunpack.c.l.b16 %v86
    %v345 = vunpack.c.l.b16 %v87
    %v346 = vunpack.c.l.b16 %v88
    %v347 = vunpack.c.l.b16 %v89
    %v348 = vunpack.c.l.b16 %v90
    %v349 = vunpack.c.l.b16 %v91
    %v350 = vunpack.c.l.b16 %v92
    %v351 = vunpack.c.l.b16 %v93
    %v352 = vunpack.c.l.b16 %v94
    %v353 = vunpack.c.l.b16 %v95
    %v354 = vunpack.c.l.b16 %v96
    %v355 = vunpack.c.l.b16 %v97
    %v356 = vunpack.c.l.b16 %v98
    %v357 = vunpack.c.l.b16 %v99
    %v358 = vunpack.c.l.b16 %v100
    %v359 = vunpack.c.l.b16 %v101
    %v360 = vunpack.c.l.b16 %v102
    %v361 = vunpack.c.l.b16 %v103
    %v362 = vunpack.c.l.b16 %v104
    %v363 = vunpack.c.l.b16 %v105
    %v364 = vunpack.c.l.b16 %v106
    %v365 = vunpack.c.l.b16 %v107
    %v366 = vunpack.c.l.b16 %v108
    %v367 = vunpack.c.l.b16 %v109
    %v368 = vunpack.c.l.b16 %v110
    %v369 = vunpack.c.l.b16 %v111
    %v370 = vunpack.c.l.b16 %v112
    %v371 = vunpack.c.l.b16 %v113
    %v372 = vunpack.c.l.b16 %v114
    %v373 = vunpack.c.l.b16 %v115
    %v374 = vunpack.c.l.b16 %v116
    %v375 = vunpack.c.l.b16 %v117
    %v376 = vunpack.c.l.b16 %v118
    %v377 = vunpack.c.l.b16 %v119
    %v378 = vunpack.c.l.b16 %v120
    %v379 = vunpack.c.l.b16 %v121
    %v380 = vunpack.c.l.b16 %v122
    %v381 = vunpack.c.l.b16 %v123
    %v382 = vunpack.c.l.b16 %v124
    %v383 = vunpack.c.l.b16 %v125
    %v384 = vunpack.c.l.b16 %v126
    %v385 = vunpack.c.l.b16 %v127
    %v386 = vunpack.c.l.b16 %v128
    %v387 = vunpack.c.l.b16 %v129
    %v388 = vunpack.c.l.b16 %v130
    %v389 = vunpack.c.l.b16 %v131
    %v390 = vunpack.c.l.b16 %v132
    %v391 = vunpack.c.l.b16 %v133
    %v392 = vunpack.c.l.b16 %v134
    %v393 = vunpack.c.l.b16 %v135
    %v394 = vunpack.c.l.b16 %v136
    %v395 = vunpack.c.l.b16 %v137
    %v396 = vunpack.c.l.b16 %v138
    %v397 = vunpack.c.l.b16 %v139
    %v398 = vunpack.c.l.b16 %v140
    %v399 = vunpack.c.l.b16 %v141
    %v400 = vunpack.c.l.b16 %v142
    %v401 = vunpack.c.l.b16 %v143
    %v402 = vunpack.c.l.b16 %v144
    %v403 = vunpack.c.l.b16 %v145
    %v404 = vunpack.c.l.b16 %v146
    %v405 = vunpack.c.l.b16 %v147
    %v406 = vunpack.c.l.b16 %v148
    %v407 = vunpack.c.l.b16 %v149
    %v408 = vunpack.c.l.b16 %v150
    %v409 = vunpack.c.l.b16 %v151
    %v410 = vpack.c.b16 %v315, %v314
    %v411 = vpack.c.b16 %v317, %v316
    %v412 = vpack.c.b16 %v319, %v318
    %v413 = vpack.c.b16 %v321, %v320
    %v414 = vpack.c.b16 %v323, %v322
    %v415 = vpack.c.b16 %v325, %v324
    %v416 = vpack.c.b16 %v327, %v326
    %v417 = vpack.c.b16 %v329, %v328
    %v418 = vpack.c.b16 %v331, %v330
    %v419 = vpack.c.b16 %v333, %v332
    %v420 = vpack.c.b16 %v335, %v334
    %v421 = vpack.c.b16 %v337, %v336
    %v422 = vpack.c.b16 %v339, %v338
    %v423 = vpack.c.b16 %v341, %v340
    %v424 = vpack.c.b16 %v343, %v342
    %v425 = vpack.c.b16 %v345, %v344
    %v426 = vpack.c.b16 %v347, %v346
    %v427 = vpack.c.b16 %v349, %v348
    %v428 = vpack.c.b16 %v351, %v350
    %v429 = vpack.c.b16 %v353, %v352
    %v430 = vpack.c.b16 %v355, %v354
    %v431 = vpack.c.b16 %v357, %v356
    %v432 = vpack.c.b16 %v359, %v358
    %v433 = vpack.c.b16 %v361, %v360
    %v434 = vpack.c.b16 %v363, %v362
    %v435 = vpack.c.b16 %v365, %v364
    %v436 = vpack.c.b16 %v367, %v366
    %v437 = vpack.c.b16 %v369, %v368
    %v438 = vpack.c.b16 %v371, %v370
    %v439 = vpack.c.b16 %v373, %v372
    %v440 = vpack.c.b16 %v375, %v374
    %v441 = vpack.c.b16 %v377, %v376
    %v442 = vpack.c.b16 %v379, %v378
    %v443 = vpack.c.b16 %v381, %v380
    %v444 = vpack.c.b16 %v383, %v382
    %v445 = vpack.c.b16 %v385, %v384
    %v446 = vpack.c.b16 %v387, %v386
    %v447 = vpack.c.b16 %v389, %v388
    %v448 = vpack.c.b16 %v391, %v390
    %v449 = vpack.c.b16 %v393, %v392
    %v450 = vpack.c.b16 %v395, %v394
    %v451 = vpack.c.b16 %v397, %v396
    %v452 = vpack.c.b16 %v399, %v398
    %v453 = vpack.c.b16 %v401, %v400
    %v454 = vpack.c.b16 %v403, %v402
    %v455 = vpack.c.b16 %v405, %v404
    %v456 = vpack.c.b16 %v407, %v406
    %v457 = vpack.c.b16 %v409, %v408
    %506 = vmatprep.subr.bf16.mxu0 0
    %507 = vmatpush1.bf16.msra.mxu0 %v417
    %508 = vmatprep.subr.bf16.mxu0 0
    %509 = vmatpush1.bf16.msra.mxu0 %v416
    %510 = vmatprep.subr.bf16.mxu0 0
    %511 = vmatpush1.bf16.msra.mxu0 %v415
    %512 = vmatprep.subr.bf16.mxu0 0
    %513 = vmatpush1.bf16.msra.mxu0 %v414
    %514 = vmatprep.subr.bf16.mxu0 0
    %515 = vmatpush1.bf16.msra.mxu0 %v413
    %516 = vmatprep.subr.bf16.mxu0 0
    %517 = vmatpush1.bf16.msra.mxu0 %v412
    %518 = vmatprep.subr.bf16.mxu0 0
    %519 = vmatpush1.bf16.msra.mxu0 %v411
    %520 = vmatprep.subr.bf16.mxu0 0
    %521 = vmatpush1.bf16.msra.mxu0 %v410
    %522 = vmatprep.subr.bf16.mxu0 0
    %523 = vmatpush2.bf16.msra.mxu0 %v425
    %524 = vmatprep.subr.bf16.mxu0 0
    %525 = vmatpush2.bf16.msra.mxu0 %v424
    %526 = vmatprep.subr.bf16.mxu0 0
    %527 = vmatpush2.bf16.msra.mxu0 %v423
    %528 = vmatprep.subr.bf16.mxu0 0
    %529 = vmatpush2.bf16.msra.mxu0 %v422
    %530 = vmatprep.subr.bf16.mxu0 0
    %531 = vmatpush2.bf16.msra.mxu0 %v421
    %532 = vmatprep.subr.bf16.mxu0 0
    %533 = vmatpush2.bf16.msra.mxu0 %v420
    %534 = vmatprep.subr.bf16.mxu0 0
    %535 = vmatpush2.bf16.msra.mxu0 %v419
    %536 = vmatprep.subr.bf16.mxu0 0
    %537 = vmatpush2.bf16.msra.mxu0 %v418
    %538 = vmatprep.mubr.bf16.mxu0 %v195
    %539 = vmatmul.mubr.bf16.gmra.mxu0 %v194
    %v540 = vpop.f32.mrf.mxu0
    %v541 = vadd.f32 %v157, %v540
    %v542 = vpop.f32.mrf.mxu0
    %v543 = vpop.f32.mrf.mxu0
    %v544 = vadd.f32 %v157, %v543
    %v545 = vpop.f32.mrf.mxu0
    %546 = vmatprep.mubr.bf16.mxu0 %v201
    %547 = vmatmul.mubr.bf16.gmra.mxu0 %v200
    %v548 = vpop.f32.mrf.mxu0
    %v549 = vadd.f32 %v157, %v548
    %v550 = vpop.f32.mrf.mxu0
    %v551 = vpop.f32.mrf.mxu0
    %v552 = vadd.f32 %v157, %v551
    %v553 = vpop.f32.mrf.mxu0
    %554 = vdwg.mxu0
    %555 = vmatprep.subr.bf16.mxu0 0
    %556 = vmatpush1.bf16.msra.mxu0 %v433
    %557 = vmatprep.subr.bf16.mxu0 0
    %558 = vmatpush1.bf16.msra.mxu0 %v432
    %559 = vmatprep.subr.bf16.mxu0 0
    %560 = vmatpush1.bf16.msra.mxu0 %v431
    %561 = vmatprep.subr.bf16.mxu0 0
    %562 = vmatpush1.bf16.msra.mxu0 %v430
    %563 = vmatprep.subr.bf16.mxu0 0
    %564 = vmatpush1.bf16.msra.mxu0 %v429
    %565 = vmatprep.subr.bf16.mxu0 0
    %566 = vmatpush1.bf16.msra.mxu0 %v428
    %567 = vmatprep.subr.bf16.mxu0 0
    %568 = vmatpush1.bf16.msra.mxu0 %v427
    %569 = vmatprep.subr.bf16.mxu0 0
    %570 = vmatpush1.bf16.msra.mxu0 %v426
    %571 = vmatprep.subr.bf16.mxu0 0
    %572 = vmatpush2.bf16.msra.mxu0 %v441
    %573 = vmatprep.subr.bf16.mxu0 0
    %574 = vmatpush2.bf16.msra.mxu0 %v440
    %575 = vmatprep.subr.bf16.mxu0 0
    %576 = vmatpush2.bf16.msra.mxu0 %v439
    %577 = vmatprep.subr.bf16.mxu0 0
    %578 = vmatpush2.bf16.msra.mxu0 %v438
    %579 = vmatprep.subr.bf16.mxu0 0
    %580 = vmatpush2.bf16.msra.mxu0 %v437
    %581 = vmatprep.subr.bf16.mxu0 0
    %582 = vmatpush2.bf16.msra.mxu0 %v436
    %583 = vmatprep.subr.bf16.mxu0 0
    %584 = vmatpush2.bf16.msra.mxu0 %v435
    %585 = vmatprep.subr.bf16.mxu0 0
    %586 = vmatpush2.bf16.msra.mxu0 %v434
    %587 = vmatprep.mubr.bf16.mxu0 %v197
    %588 = vmatmul.mubr.bf16.gmra.mxu0 %v196
    %v589 = vpop.f32.mrf.mxu0
    %v590 = vadd.f32 %v541, %v589
    %v591 = vpop.f32.mrf.mxu0
    %v592 = vpop.f32.mrf.mxu0
    %v593 = vadd.f32 %v544, %v592
    %v594 = vpop.f32.mrf.mxu0
    %595 = vmatprep.mubr.bf16.mxu0 %v203
    %596 = vmatmul.mubr.bf16.gmra.mxu0 %v202
    %v597 = vpop.f32.mrf.mxu0
    %v598 = vadd.f32 %v549, %v597
    %v599 = vpop.f32.mrf.mxu0
    %v600 = vpop.f32.mrf.mxu0
    %v601 = vadd.f32 %v552, %v600
    %v602 = vpop.f32.mrf.mxu0
    %603 = vdwg.mxu0
    %604 = vmatprep.subr.bf16.mxu0 0
    %605 = vmatpush1.bf16.msra.mxu0 %v449
    %606 = vmatprep.subr.bf16.mxu0 0
    %607 = vmatpush1.bf16.msra.mxu0 %v448
    %608 = vmatprep.subr.bf16.mxu0 0
    %609 = vmatpush1.bf16.msra.mxu0 %v447
    %610 = vmatprep.subr.bf16.mxu0 0
    %611 = vmatpush1.bf16.msra.mxu0 %v446
    %612 = vmatprep.subr.bf16.mxu0 0
    %613 = vmatpush1.bf16.msra.mxu0 %v445
    %614 = vmatprep.subr.bf16.mxu0 0
    %615 = vmatpush1.bf16.msra.mxu0 %v444
    %616 = vmatprep.subr.bf16.mxu0 0
    %617 = vmatpush1.bf16.msra.mxu0 %v443
    %618 = vmatprep.subr.bf16.mxu0 0
    %619 = vmatpush1.bf16.msra.mxu0 %v442
    %620 = vmatprep.subr.bf16.mxu0 0
    %621 = vmatpush2.bf16.msra.mxu0 %v457
    %622 = vmatprep.subr.bf16.mxu0 0
    %623 = vmatpush2.bf16.msra.mxu0 %v456
    %624 = vmatprep.subr.bf16.mxu0 0
    %625 = vmatpush2.bf16.msra.mxu0 %v455
    %626 = vmatprep.subr.bf16.mxu0 0
    %627 = vmatpush2.bf16.msra.mxu0 %v454
    %628 = vmatprep.subr.bf16.mxu0 0
    %629 = vmatpush2.bf16.msra.mxu0 %v453
    %630 = vmatprep.subr.bf16.mxu0 0
    %631 = vmatpush2.bf16.msra.mxu0 %v452
    %632 = vmatprep.subr.bf16.mxu0 0
    %633 = vmatpush2.bf16.msra.mxu0 %v451
    %634 = vmatprep.subr.bf16.mxu0 0
    %635 = vmatpush2.bf16.msra.mxu0 %v450
    %636 = vmatprep.mubr.bf16.mxu0 %v199
    %637 = vmatmul.mubr.bf16.gmra.mxu0 %v198
    %v638 = vpop.f32.mrf.mxu0
    %v639 = vadd.f32 %v590, %v638
    %v640 = vpop.f32.mrf.mxu0
    %v641 = vpop.f32.mrf.mxu0
    %v642 = vadd.f32 %v593, %v641
    %v643 = vpop.f32.mrf.mxu0
    %644 = vmatprep.mubr.bf16.mxu0 %v205
    %645 = vmatmul.mubr.bf16.gmra.mxu0 %v204
    %v646 = vpop.f32.mrf.mxu0
    %v647 = vadd.f32 %v598, %v646
    %v648 = vpop.f32.mrf.mxu0
    %v649 = vpop.f32.mrf.mxu0
    %v650 = vadd.f32 %v601, %v649
    %v651 = vpop.f32.mrf.mxu0
    %652 = vdwg.mxu0
    %v653 = vpack.c.bf16 %v642, %v639
    %v654 = vpack.c.bf16 %v650, %v647
    %v657 = vunpack.c.l.b16 %v653
    %v658 = vunpack.c.h.b16 %v653
    %v659 = vunpack.c.l.b16 %v654
    %v660 = vunpack.c.h.b16 %v654
    %v661 = vpack.c.b16 %v657, %v657
    %v662 = vpack.c.b16 %v658, %v658
    %v663 = vpack.c.b16 %v659, %v659
    %v664 = vpack.c.b16 %v660, %v660
    %669 = vst [vmem:[#allocation7] sm:$0xf] %v661
    %670 = vst [vmem:[#allocation7 + $0x4] sm:$0xf] %v662
    %671 = vst [vmem:[#allocation7 + $0x8] sm:$0xf] %v663
    %672 = vst [vmem:[#allocation7 + $0xc] sm:$0xf] %v664
    // Predicated region
    $region22: #{tpu_custom_call.1} parent=1 // pred_check
      _
    $region23: #{tpu_custom_call.1} parent=1 // pred_check_branch
      %674 = sbr.rel (0) target = $region25
    $region24: #{tpu_custom_call.1} parent=1 // pred_region
      %s676 = ssub.s32 256, 256
      %677 = vsyncadd [#allocation4], %s676
      %s678 = sshll.u32 [#allocation7], 4
      %s679 = int_to_ptr.vmem [resolvable:$true] %s678
      %684 = dma.vmem_to_hbm [thread:$0]  %s679, 256, %s3, [#allocation4], 64, 64, 4
    $region25: #{tpu_custom_call.1} parent=1 // pred_fallthru
      _
    // Predicated region
    $region26: #{tpu_custom_call.1} parent=1 // pred_check
      _
    $region27: #{tpu_custom_call.1} parent=1 // pred_check_branch
      %686 = sbr.rel (0) target = $region29
    $region28: #{tpu_custom_call.1} parent=1 // pred_region
      %687 = dma.done [#allocation4], 256
    $region29: #{tpu_custom_call.1} parent=1 // pred_fallthru
      _
    %688 = vsyncpa [#allocation3], 1
    %689 = vsyncpa [#allocation6], 1
    %690 = vsyncpa [#allocation4], 1

</llo_original>
